<compile_context>
chip_gen: v7x
topology: tpu7x:2x2x1
jax: 0.10.0
libtpu: 0.0.40
codegen_flags: <defaults>
</compile_context>

<pallas_src>
import functools
import re

import jax
import jax.numpy as jnp
from jax import lax
from jax.experimental import pallas as pl
from jax.experimental.pallas import tpu as pltpu

_LANES = 128
_SUBLANES = 8


def _tpu_generation():
    """Best-effort TPU generation from device_kind; 0 if unknown."""
    try:
        kind = jax.devices()[0].device_kind.lower()
    except Exception:  # pragma: no cover - defensive
        return 0
    m = re.search(r"v(\d+)", kind)
    return int(m.group(1)) if m else 0


def _rmse_partial_kernel(x_ref, y_ref, out_ref, *, num_row_blocks, tail_rows,
                         has_idle_steps, acc_rows):
    """Accumulate sum((x - y)^2) for one split into an (acc_rows, 128) block."""
    i = pl.program_id(1)                  # step within split ("arbitrary")

    @pl.when(i == 0)
    def _init():
        out_ref[...] = jnp.zeros_like(out_ref)

    d = x_ref[...].astype(jnp.float32) - y_ref[...].astype(jnp.float32)
    sq = d * d
    tile_rows = sq.shape[0]

    def _accumulate(vals):
        if tile_rows % acc_rows == 0:
            # acc_rows/8 independent vreg accumulation chains -> good VALU ILP.
            out_ref[0] += vals.reshape(tile_rows // acc_rows, acc_rows,
                                       _LANES).sum(axis=0)
        else:
            # Small single-block arrays only (rows < 8 aligned): one XLU
            # cross-sublane reduce, deposited in row 0 via a full-block store.
            row_sum = jnp.broadcast_to(vals.sum(axis=0, keepdims=True),
                                       (acc_rows, _LANES))
            first = lax.broadcasted_iota(jnp.int32, (acc_rows, _LANES), 0) == 0
            out_ref[0] += jnp.where(first, row_sum, 0.0)

    if tail_rows is None and not has_idle_steps:
        # Every row block is full and every grid step maps to a real block.
        _accumulate(sq)
    else:
        c = pl.program_id(0)              # split index ("core_parallel"/idle)
        g = c * pl.num_programs(1) + i    # global row-block index

        if tail_rows is not None:
            @pl.when(g == num_row_blocks - 1)
            def _tail():
                # Last row block extends past the array; Pallas pads it with
                # unspecified rows -> mask by row index (lanes are all valid).
                ridx = lax.broadcasted_iota(jnp.int32, sq.shape, 0)
                _accumulate(jnp.where(ridx < tail_rows, sq, 0.0))

            full_cond = g < num_row_blocks - 1
        else:
            full_cond = g < num_row_blocks

        @pl.when(full_cond)
        def _full():
            _accumulate(sq)


def rmse_loss(pred, target):
    assert pred.shape == target.shape, "pred/target must have the same shape"
    n = pred.size
    assert n > 0

    x = pred.reshape(-1)
    y = target.reshape(-1)

    gen = _tpu_generation()
    num_cores = 2 if gen >= 7 else 1          # TensorCores per chip
    base_rows = 8192 if gen >= 7 else 4096    # f32 rows per tile (2-4 MiB)
    itemsize = max(jnp.dtype(pred.dtype).itemsize,
                   jnp.dtype(target.dtype).itemsize)
    tile_cap = max(_SUBLANES,
                   (base_rows * 4 // itemsize) // _SUBLANES * _SUBLANES)

    # Ragged (< 128 element) remainder handled in plain JAX; no full-array pad.
    # TODO(synk): a fully zero-copy ragged path (no prefix slice) would need
    # memory_space=pl.ANY + manual make_async_copy of flat 128-aligned chunks.
    r = n % _LANES
    if r:
        rem = jnp.sum((x[n - r:].astype(jnp.float32) -
                       y[n - r:].astype(jnp.float32)) ** 2)
        x = x[: n - r]
        y = y[: n - r]
    else:
        rem = jnp.float32(0.0)

    rows = (n - r) // _LANES
    if rows == 0:                               # entire input < 128 elements
        return jnp.sqrt(rem / jnp.float32(n))

    x2 = x.reshape(rows, _LANES)                # free view when r == 0
    y2 = y.reshape(rows, _LANES)

    tile_rows = rows if rows <= tile_cap else tile_cap
    num_row_blocks = pl.cdiv(rows, tile_rows)
    num_splits = num_cores if num_row_blocks >= num_cores else 1
    steps_per_split = pl.cdiv(num_row_blocks, num_splits)
    has_idle_steps = (num_splits * steps_per_split) != num_row_blocks

    # Valid rows in the final (possibly partial) row block.
    tail_rows = None
    if rows % tile_rows != 0:
        tail_rows = rows - (num_row_blocks - 1) * tile_rows

    # Independent accumulator rows (K = acc_rows / 8 parallel chains).
    acc_rows = _SUBLANES
    for cand in (64, 32, 16, 8):
        if tile_rows % cand == 0:
            acc_rows = cand
            break

    if has_idle_steps:
        # Clamp so idle trailing steps never DMA out of bounds; their
        # contribution is skipped inside the kernel.  Only on multi-TC chips.
        def in_map(c, i):
            return (jnp.minimum(c * steps_per_split + i, num_row_blocks - 1), 0)
    else:
        def in_map(c, i):
            return (c * steps_per_split + i, 0)

    kernel = functools.partial(
        _rmse_partial_kernel,
        num_row_blocks=num_row_blocks,
        tail_rows=tail_rows,
        has_idle_steps=has_idle_steps,
        acc_rows=acc_rows,
    )

    if num_splits > 1:
        dim_sem = (pltpu.CORE_PARALLEL, pltpu.ARBITRARY)   # shard across TCs
    else:
        dim_sem = (pltpu.ARBITRARY, pltpu.ARBITRARY)

    in_bytes = rows * _LANES * (jnp.dtype(pred.dtype).itemsize +
                                jnp.dtype(target.dtype).itemsize)
    cost = pl.CostEstimate(
        flops=3 * rows * _LANES,
        transcendentals=0,
        bytes_accessed=in_bytes + num_splits * acc_rows * _LANES * 4,
    )

    partials = pl.pallas_call(
        kernel,
        out_shape=jax.ShapeDtypeStruct((num_splits, acc_rows, _LANES),
                                       jnp.float32),
        grid_spec=pltpu.PrefetchScalarGridSpec(
            num_scalar_prefetch=0,
            grid=(num_splits, steps_per_split),
            in_specs=[
                pl.BlockSpec((tile_rows, _LANES), in_map),
                pl.BlockSpec((tile_rows, _LANES), in_map),
            ],
            out_specs=pl.BlockSpec((1, acc_rows, _LANES), lambda c, i: (c, 0, 0)),
        ),
        compiler_params=pltpu.CompilerParams(dimension_semantics=dim_sem),
        cost_estimate=cost,
    )(x2, y2)

    # Single cross-lane reduce + mean + sqrt, done once outside the hot loop.
    return jnp.sqrt((jnp.sum(partials) + rem) / jnp.float32(n))


if __name__ == "__main__":
    key = jax.random.PRNGKey(0)
    k1, k2, k3, k4 = jax.random.split(key, 4)

    rmse = jax.jit(rmse_loss)

    # Small NCHW-like prediction/target pair (n % 128 == 0: zero-copy path).
    pred = jax.random.normal(k1, (2, 4, 16, 16), dtype=jnp.float32)
    target = jax.random.normal(k2, (2, 4, 16, 16), dtype=jnp.float32)
    loss = rmse(pred, target)
    jax.block_until_ready(loss)
    ref = jnp.sqrt(jnp.mean((pred - target) ** 2))
    assert jnp.allclose(loss, ref, rtol=1e-5, atol=1e-6), (loss, ref)

    # Ragged size (n % 128 != 0): exercises the JAX-remainder + non-multiple-
    # of-8 rows fallback path.
    pred2 = jax.random.normal(k3, (3, 5, 7, 11), dtype=jnp.float32)
    target2 = jax.random.normal(k4, (3, 5, 7, 11), dtype=jnp.float32)
    loss2 = rmse(pred2, target2)
    jax.block_until_ready(loss2)
    ref2 = jnp.sqrt(jnp.mean((pred2 - target2) ** 2))
    assert jnp.allclose(loss2, ref2, rtol=1e-5, atol=1e-6), (loss2, ref2)

    print("KERNEL_OK")
</pallas_src>

<mosaic_0001>
module attributes {stable_mosaic.version = 11 : i64} {
  func.func @_rmse_partial_kernel(%arg0: i32, %arg1: i32, %arg2: memref<16x128xf32, #tpu.memory_space<vmem>>, %arg3: memref<16x128xf32, #tpu.memory_space<vmem>>, %arg4: memref<1x16x128xf32, #tpu.memory_space<vmem>>) attributes {dimension_semantics = [#tpu.dimension_semantics<arbitrary>, #tpu.dimension_semantics<arbitrary>], iteration_bounds = array<i64: 1, 1>, scalar_prefetch = 0 : i64, scratch_operands = 0 : i64, tpu.core_type = #tpu.core_type<tc>, window_params = [{transform_indices = @transform_0, window_bounds = array<i64: 16, 128>}, {transform_indices = @transform_1, window_bounds = array<i64: 16, 128>}, {transform_indices = @transform_2, window_bounds = array<i64: 1, 16, 128>}]} {
    %c0_i32 = arith.constant 0 : i32
    %0 = arith.cmpi eq, %arg1, %c0_i32 : i32
    %1 = arith.extui %0 : i1 to i32
    %c0_i32_0 = arith.constant 0 : i32
    %2 = arith.cmpi ne, %1, %c0_i32_0 : i32
    scf.if %2 {
      %cst_10 = arith.constant 0.000000e+00 : f32
      %15 = vector.broadcast %cst_10 : f32 to vector<1x16x128xf32>
      %c0_11 = arith.constant 0 : index
      %c0_12 = arith.constant 0 : index
      %c0_13 = arith.constant 0 : index
      %16 = vector.load %arg4[%c0_11, %c0_12, %c0_13] : memref<1x16x128xf32, #tpu.memory_space<vmem>>, vector<1x16x128xf32>
      tpu.vector_store %arg4[%c0_11, %c0_12, %c0_13], %15 {strides = array<i32>} : memref<1x16x128xf32, #tpu.memory_space<vmem>>, vector<1x16x128xf32>,
    } else {
    }
    %c0 = arith.constant 0 : index
    %c0_1 = arith.constant 0 : index
    %3 = vector.load %arg2[%c0, %c0_1] : memref<16x128xf32, #tpu.memory_space<vmem>>, vector<16x128xf32>
    %c0_2 = arith.constant 0 : index
    %c0_3 = arith.constant 0 : index
    %4 = vector.load %arg3[%c0_2, %c0_3] : memref<16x128xf32, #tpu.memory_space<vmem>>, vector<16x128xf32>
    %5 = arith.subf %3, %4 : vector<16x128xf32>
    %6 = arith.mulf %5, %5 : vector<16x128xf32>
    %c0_4 = arith.constant 0 : index
    %c0_5 = arith.constant 0 : index
    %c0_6 = arith.constant 0 : index
    %7 = vector.load %arg4[%c0_4, %c0_5, %c0_6] : memref<1x16x128xf32, #tpu.memory_space<vmem>>, vector<1x16x128xf32>
    %8 = vector.shape_cast %7 : vector<1x16x128xf32> to vector<16x128xf32>
    %9 = vector.shape_cast %6 : vector<16x128xf32> to vector<1x16x128xf32>
    %cst = arith.constant dense<0.000000e+00> : vector<16x128xf32>
    %10 = vector.multi_reduction <add>, %9, %cst [0] : vector<1x16x128xf32> to vector<16x128xf32>
    %11 = arith.addf %8, %10 : vector<16x128xf32>
    %c0_7 = arith.constant 0 : index
    %c0_8 = arith.constant 0 : index
    %c0_9 = arith.constant 0 : index
    %12 = vector.load %arg4[%c0_7, %c0_8, %c0_9] : memref<1x16x128xf32, #tpu.memory_space<vmem>>, vector<1x16x128xf32>
    %13 = vector.shape_cast %12 : vector<1x16x128xf32> to vector<16x128xf32>
    %14 = vector.shape_cast %11 : vector<16x128xf32> to vector<1x16x128xf32>
    tpu.vector_store %arg4[%c0_7, %c0_8, %c0_9], %14 {strides = array<i32>} : memref<1x16x128xf32, #tpu.memory_space<vmem>>, vector<1x16x128xf32>,
    return
  }
  func.func @transform_0(%arg0: i32, %arg1: i32) -> (i32, i32) {
    %c1_i32 = arith.constant 1 : i32
    %0 = arith.muli %arg0, %c1_i32 : i32
    %1 = arith.addi %0, %arg1 : i32
    %c0_i32 = arith.constant 0 : i32
    %c0_i32_0 = arith.constant 0 : i32
    return %1, %c0_i32 : i32, i32
  }
  func.func @transform_1(%arg0: i32, %arg1: i32) -> (i32, i32) {
    %c1_i32 = arith.constant 1 : i32
    %0 = arith.muli %arg0, %c1_i32 : i32
    %1 = arith.addi %0, %arg1 : i32
    %c0_i32 = arith.constant 0 : i32
    %c0_i32_0 = arith.constant 0 : i32
    return %1, %c0_i32 : i32, i32
  }
  func.func @transform_2(%arg0: i32, %arg1: i32) -> (i32, i32, i32) {
    %c0_i32 = arith.constant 0 : i32
    %c0_i32_0 = arith.constant 0 : i32
    %c0_i32_1 = arith.constant 0 : i32
    return %arg0, %c0_i32, %c0_i32_0 : i32, i32, i32
  }
}

</mosaic_0001>

<llo_original>
// kernel: rmse_loss.1
$region0: #{rmse_loss.1}
  #allocation0 [shape = 'u32[]', space=smem, size = 0x4, offset = 0x4, fixed_abs, tag = 'smem constant byte address 0x4 - core index']
  #allocation1 [shape = 'u32[144,128]{1,0:T(1,128)}', space=vmem, size = 0x12000, scoped, tag = 'internal scratch']
  %s0 = inlined_call_operand.vmem [shape: f32[16,128], index: 0, kind: input, shape index: {}]
  %s1 = inlined_call_operand.vmem [shape: f32[16,128], index: 1, kind: input, shape index: {}]
  %s2 = inlined_call_operand.vmem [shape: f32[1,16,128], index: 2, kind: output, shape index: {}]
  %s3 = sld [smem:[#allocation0]]
  $region22: #{rmse_loss.1} parent=0
    _
  %s5 = ssub.s32 1, %s3
  %s6 = scalar_select 0, %s5, %s3
  // Predicated region
  $region2: #{rmse_loss.1} parent=0 // pred_check
    _
  $region3: #{rmse_loss.1} parent=0 // pred_check_branch
    %8 = sbr.rel (0) target = $region5
  $region4: #{rmse_loss.1} parent=0 // pred_region
    %s9 = sadd.s32 0, 0
    %s10 = smul.u32 2, %s9
    %p11 = scmp.lt.s32.totalorder %s10, 1
    %s12 = scalar_select %p11, %s10, 1
    %s13 = smul.addr %s12, 8
    %s14 = scalar_lea.vmem %s0, %s13
    %s15 = sadd.s32 0, 0
    %s16 = smul.u32 2, %s15
  $region5: #{rmse_loss.1} parent=0 // pred_fallthru
    _
  // Predicated region
  $region6: #{rmse_loss.1} parent=0 // pred_check
    _
  $region7: #{rmse_loss.1} parent=0 // pred_check_branch
    %18 = sbr.rel (0) target = $region9
  $region8: #{rmse_loss.1} parent=0 // pred_region
    %s19 = sadd.s32 0, 0
    %s20 = smul.u32 2, %s19
    %p21 = scmp.lt.s32.totalorder %s20, 1
    %s22 = scalar_select %p21, %s20, 1
    %s23 = smul.addr %s22, 8
    %s24 = scalar_lea.vmem %s1, %s23
    %s25 = sadd.s32 0, 0
    %s26 = smul.u32 2, %s25
  $region9: #{rmse_loss.1} parent=0 // pred_fallthru
    _
  %s27 = sadd.s32 0, 0
  %s28 = smul.u32 2, %s27
  %p29 = scmp.lt.s32.totalorder %s28, 1
  %s30 = scalar_select %p29, %s28, 1
  %s31 = smul.addr %s30, 8
  %s32 = scalar_lea.vmem %s0, %s31
  %s33 = sadd.s32 0, 0
  %s34 = smul.u32 2, %s33
  %p35 = scmp.lt.s32.totalorder %s34, 1
  %s36 = scalar_select %p35, %s34, 1
  %s37 = smul.addr %s36, 8
  %s38 = scalar_lea.vmem %s1, %s37
  %s39 = sadd.s32 0, 0
  %s40 = smul.u32 2, %s39
  %p41 = scmp.lt.s32.totalorder %s40, 1
  %s42 = scalar_select %p41, %s40, 1
  %s43 = smul.addr %s42, 8
  %s44 = scalar_lea.vmem %s0, %s43
  %s45 = sadd.s32 0, 0
  %s46 = smul.u32 2, %s45
  %s47 = sadd.s32 0, 0
  %s48 = smul.u32 2, %s47
  %p49 = scmp.lt.s32.totalorder %s48, 1
  %s50 = scalar_select %p49, %s48, 1
  %s51 = smul.addr %s50, 8
  %s52 = scalar_lea.vmem %s1, %s51
  %s53 = sadd.s32 0, 0
  %s54 = smul.u32 2, %s53
  %p55 = scmp.eq.s32.totalorder 0, 0
  // Predicated region
  $region10: #{rmse_loss.1} parent=0 // pred_check
    %p56 = pneg %p55
  $region11: #{rmse_loss.1} parent=0 // pred_check_branch
    %58 = sbr.rel (%p56) target = $region13
  $region12: #{rmse_loss.1} parent=0 // pred_region
    %59 = vst [vmem:[%s2] sm:$0xff] 0.0
    %60 = vst [vmem:[%s2 + $0x8] sm:$0xff] 0.0
  $region13: #{rmse_loss.1} parent=0 // pred_fallthru
    _
  %v61 = vld [vmem:[%s44] sm:$0xff]
  %v62 = vld [vmem:[%s44 + $0x8] sm:$0xff]
  %v63 = vld [vmem:[%s52] sm:$0xff]
  %v64 = vld [vmem:[%s52 + $0x8] sm:$0xff]
  %v65 = vsub.f32 %v61, %v63
  %v66 = vsub.f32 %v62, %v64
  %v67 = vmul.f32 %v65, %v65
  %v68 = vmul.f32 %v66, %v66
  %v69 = vld [vmem:[%s2] sm:$0xff]
  %v70 = vld [vmem:[%s2 + $0x8] sm:$0xff]
  %v71 = vadd.f32 %v67, 0.0
  %v72 = vadd.f32 %v68, 0.0
  %v73 = vadd.f32 %v69, %v71
  %v74 = vadd.f32 %v70, %v72
  %75 = vst [vmem:[%s2] sm:$0xff] %v73
  %76 = vst [vmem:[%s2 + $0x8] sm:$0xff] %v74
  // Predicated region
  $region14: #{rmse_loss.1} parent=0 // pred_check
    _
  $region15: #{rmse_loss.1} parent=0 // pred_check_branch
    %78 = sbr.rel (0) target = $region17
  $region16: #{rmse_loss.1} parent=0 // pred_region
    _
  $region17: #{rmse_loss.1} parent=0 // pred_fallthru
    _
  // Predicated region
  $region18: #{rmse_loss.1} parent=0 // pred_check
    _
  $region19: #{rmse_loss.1} parent=0 // pred_check_branch
    %80 = sbr.rel (0) target = $region21
  $region20: #{rmse_loss.1} parent=0 // pred_region
    _
  $region21: #{rmse_loss.1} parent=0 // pred_fallthru
    _

</llo_original>
